<compile_context>
chip_gen: v6e
topology: v6e:2x2x1
jax: 0.10.0
libtpu: 0.0.40
codegen_flags: <defaults>
</compile_context>

<pallas_src>
import functools
import math

import jax
import jax.numpy as jnp
from jax.experimental import pallas as pl
from jax.experimental.pallas import tpu as pltpu


def _conv_block_kernel(x_ref, w_ref, scale_ref, shift_ref, o_ref, *,
                       NB, KH, KW, Cp, WP, HO, WO, OH, OW,
                       dilation, pooling, L):
    """Processes NB images per grid step.

    x_ref:     (NB, Cp, HP*WP)  flattened, channel-padded input (spatial on lanes)
    w_ref:     (O, KH*KW*Cp)    weight, rows = out channel, cols = (kh, kw, c_pad)
    scale_ref: (O, 1)           fused eval-mode BatchNorm scale (ones if BN off)
    shift_ref: (O, 1)           fused eval-mode BatchNorm shift (zeros if BN off)
    o_ref:     (NB, O, out_w)   lane-dense output; wrapper slices the valid cols
    """
    wv = w_ref[...]                      # (O, KH*KW*Cp), compute dtype (bf16/f32)
    scale = scale_ref[...]               # (O, 1) f32
    shift = shift_ref[...]               # (O, 1) f32

    for b in range(NB):                  # small, VMEM-budgeted unroll
        xv = x_ref[b]                    # (Cp, HP*WP)

        # im2col via lane-offset slices only (no in-kernel reshapes). Every tap
        # block is Cp (= sublane quantum) rows tall, so the concatenate consists
        # of vreg-aligned copies.
        cols = []
        for dh in range(KH):
            for dw in range(KW):
                s = dilation * (dh * WP + dw)
                cols.append(xv[:, s:s + L])              # (Cp, L) static lane slice
        patches = jnp.concatenate(cols, axis=0)          # (KH*KW*Cp, L)

        # One MXU matmul per image, f32 accumulation.
        acc = jnp.dot(wv, patches, preferred_element_type=jnp.float32)   # (O, L)

        out = jnp.maximum(acc, 0.0)                       # ReLU
        out = out * scale + shift                         # eval-mode BatchNorm affine

        if pooling:
            # 2x2 max over the flat layout: max of four lane-shifted views.
            L2 = L - WP - 1
            m = jnp.maximum(
                jnp.maximum(out[:, 0:L2],       out[:, 1:L2 + 1]),
                jnp.maximum(out[:, WP:WP + L2], out[:, WP + 1:WP + 1 + L2]))
            # Keep only the pooled (even) rows in-kernel: pooled row i lives at
            # lanes [2*i*WP, 2*i*WP + 2*OW - 1) of m; its valid values sit on the
            # even local columns (extracted by the wrapper with a cheap slice).
            wrow = 2 * OW - 1
            rows = [m[:, 2 * i * WP: 2 * i * WP + wrow] for i in range(OH)]
            res = jnp.concatenate(rows, axis=1)           # (O, OH*wrow)
            o_ref[b, :, :] = res.astype(o_ref.dtype)
        else:
            # Columns >= L of the (O, HO*WP) block stay as garbage; the wrapper
            # discards them with a free reshape + slice (no jnp.pad pass).
            o_ref[b, :, :L] = out.astype(o_ref.dtype)


def conv_block_forward(x_nchw, weight_oihw, *, padding=0, dilation=1,
                       batch_norm_params=None, pooling=False,
                       compute_dtype=jnp.bfloat16):
    """Forward pass equivalent to ConvBlock.forward (groups=1, stride=1, bias=False)."""
    N, C, H, W = x_nchw.shape
    O, Cw, KH, KW = weight_oihw.shape
    # TODO(synk): grouped convolution (groups > 1) not implemented.
    assert Cw == C, "groups=1 only"

    HP, WP = H + 2 * padding, W + 2 * padding
    HO = HP - dilation * (KH - 1)
    WO = WP - dilation * (KW - 1)
    assert HO >= 1 and WO >= 1

    cd = jnp.dtype(compute_dtype)
    out_dtype = x_nchw.dtype
    # Sublane quantum of the compute dtype (8 rows f32, 16 rows bf16): pad channels
    # so every im2col tap block starts vreg-sublane-aligned (zeros are free on MXU).
    sub = max(1, (8 * 4) // cd.itemsize)
    Cp = int(math.ceil(C / sub) * sub)

    x = x_nchw.astype(compute_dtype)
    if padding or Cp != C:
        # Channel + spatial zero-pad folded into one pass.
        x = jnp.pad(x, ((0, 0), (0, Cp - C),
                        (padding, padding), (padding, padding)))
    x_flat = x.reshape(N, Cp, HP * WP)         # free reshape (H, W contiguous in NCHW)

    # Weight -> (O, KH*KW*Cp), column index (kh*KW + kw)*Cp + c (matches patch rows).
    w4 = jnp.transpose(weight_oihw, (0, 2, 3, 1))          # (O, KH, KW, C)
    if Cp != C:
        w4 = jnp.pad(w4, ((0, 0), (0, 0), (0, 0), (0, Cp - C)))
    w2 = w4.reshape(O, KH * KW * Cp).astype(compute_dtype)

    if batch_norm_params is None:
        scale = jnp.ones((O, 1), jnp.float32)
        shift = jnp.zeros((O, 1), jnp.float32)
    else:
        # TODO(synk): training-mode BatchNorm2d (per-batch statistics) needs a
        # cross-batch reduction; only eval-mode (running-stats) affine is fused here.
        gamma, beta, mean, var, eps = batch_norm_params
        inv = gamma.astype(jnp.float32) / jnp.sqrt(var.astype(jnp.float32) + eps)
        scale = inv.reshape(O, 1)
        shift = (beta.astype(jnp.float32) - mean.astype(jnp.float32) * inv).reshape(O, 1)

    L = (HO - 1) * WP + WO                     # last flat conv position we need (+1)
    if pooling:
        assert HO >= 2 and WO >= 2
        OH, OW = HO // 2, WO // 2              # PyTorch MaxPool2d floor mode
        wrow = 2 * OW - 1
        out_w = OH * wrow
    else:
        OH, OW = HO, WO
        out_w = HO * WP

    # ---- per-generation VMEM budget -> batch block NB and vmem limit ----
    try:
        vmem_cap = int(pltpu.get_tpu_info().vmem_capacity_bytes)
    except Exception:
        vmem_cap = 64 * 1024 * 1024            # conservative fallback (v7x per-TC)
    budget = int(vmem_cap * 0.85)              # headroom for compiler scratch

    cd_sz, out_sz = cd.itemsize, jnp.dtype(out_dtype).itemsize

    def est_vmem(nb):
        x_blk = nb * Cp * HP * WP * cd_sz          # input block
        o_blk = nb * O * out_w * out_sz            # output block
        w_blk = O * KH * KW * Cp * cd_sz           # weights
        tmp = nb * (KH * KW * Cp * L * cd_sz       # patches
                    + 3 * O * L * 4)               # acc / relu / pool temporaries
        return 2 * (x_blk + o_blk) + 2 * w_blk + tmp + 8 * O * 4

    nb_cap = 1
    for nb in range(1, 9):
        if est_vmem(nb) <= (3 * budget) // 4:
            nb_cap = nb
    NB = 1
    for nb in range(2, min(N, nb_cap) + 1):    # keep >= 2 grid steps for megacore
        if N % nb == 0 and N // nb >= 2:
            NB = nb
    vmem_limit = int(min(budget, max(2 * est_vmem(NB), 16 * 1024 * 1024)))

    kern = functools.partial(
        _conv_block_kernel, NB=NB, KH=KH, KW=KW, Cp=Cp, WP=WP,
        HO=HO, WO=WO, OH=OH, OW=OW, dilation=dilation, pooling=pooling, L=L)

    cost = pl.CostEstimate(
        flops=2 * N * O * C * KH * KW * HO * WO,
        transcendentals=0,
        bytes_accessed=(N * Cp * HP * WP * cd_sz + O * KH * KW * Cp * cd_sz
                        + N * O * out_w * out_sz))

    # TODO(synk): weight/scale/shift have constant index_maps; pipeline_mode=
    # pl.Buffered(1) on their specs would save the second VMEM buffer (minor).
    out_flat = pl.pallas_call(
        kern,
        out_shape=jax.ShapeDtypeStruct((N, O, out_w), out_dtype),
        grid=(N // NB,),
        in_specs=[
            pl.BlockSpec((NB, Cp, HP * WP), lambda n: (n, 0, 0)),
            pl.BlockSpec((O, KH * KW * Cp), lambda n: (0, 0)),
            pl.BlockSpec((O, 1), lambda n: (0, 0)),
            pl.BlockSpec((O, 1), lambda n: (0, 0)),
        ],
        out_specs=pl.BlockSpec((NB, O, out_w), lambda n: (n, 0, 0)),
        compiler_params=pltpu.CompilerParams(
            dimension_semantics=("parallel",),
            vmem_limit_bytes=vmem_limit),
        cost_estimate=cost,
    )(x_flat, w2, scale, shift)

    # ---- glue: free reshape + slice of the valid columns (no pad pass) ----
    if pooling:
        y = out_flat.reshape(N, O, OH, wrow)
        y = y[:, :, :, 0:wrow:2]               # even local columns = pooled values
    else:
        y = out_flat.reshape(N, O, HO, WP)[:, :, :, :WO]
    return y


def _reference(x, w, *, padding=0, dilation=1, bn=None, pooling=False,
               compute_dtype=jnp.float32):
    # Quantize operands the same way the kernel does (bf16 in, f32 accumulate).
    xq = x.astype(compute_dtype).astype(jnp.float32)
    wq = w.astype(compute_dtype).astype(jnp.float32)
    y = jax.lax.conv_general_dilated(
        xq, wq, window_strides=(1, 1),
        padding=[(padding, padding), (padding, padding)],
        rhs_dilation=(dilation, dilation),
        dimension_numbers=("NCHW", "OIHW", "NCHW"),
        preferred_element_type=jnp.float32)
    y = jnp.maximum(y, 0.0)
    if bn is not None:
        gamma, beta, mean, var, eps = bn
        g = gamma[None, :, None, None]
        b = beta[None, :, None, None]
        m = mean[None, :, None, None]
        v = var[None, :, None, None]
        y = (y - m) * (g / jnp.sqrt(v + eps)) + b
    if pooling:
        y = jax.lax.reduce_window(y, -jnp.inf, jax.lax.max,
                                  (1, 1, 2, 2), (1, 1, 2, 2), "VALID")
    return y


if __name__ == "__main__":
    key = jax.random.PRNGKey(0)
    kx, kw, kg, kb, km, kv = jax.random.split(key, 6)

    N, C_in, C_out, H, W, K = 2, 4, 8, 16, 16, 3
    x = jax.random.normal(kx, (N, C_in, H, W), dtype=jnp.float32)
    # nn.init.normal_ on the conv weight -> standard normal, shape (O, I, KH, KW)
    weight = jax.random.normal(kw, (C_out, C_in, K, K), dtype=jnp.float32)

    cd = jnp.bfloat16
    tol = dict(atol=2e-2, rtol=2e-2)

    # 1) ConvBlock(batch_norm=False, pooling=False, padding=0, dilation=1)
    out = jax.block_until_ready(
        conv_block_forward(x, weight, padding=0, dilation=1, compute_dtype=cd))
    ref = _reference(x, weight, padding=0, dilation=1, compute_dtype=cd)
    assert out.shape == ref.shape == (N, C_out, H - K + 1, W - K + 1)
    assert jnp.allclose(out, ref, **tol), "mismatch: basic conv+relu"

    # 2) ConvBlock(batch_norm=True (eval running stats), pooling=True, padding=1)
    gamma = jax.random.normal(kg, (C_out,), jnp.float32)
    beta = jax.random.normal(kb, (C_out,), jnp.float32)
    mean = jax.random.normal(km, (C_out,), jnp.float32)
    var = jax.random.uniform(kv, (C_out,), jnp.float32, minval=0.5, maxval=1.5)
    bn = (gamma, beta, mean, var, 1e-5)
    out2 = jax.block_until_ready(
        conv_block_forward(x, weight, padding=1, dilation=1,
                           batch_norm_params=bn, pooling=True, compute_dtype=cd))
    ref2 = _reference(x, weight, padding=1, dilation=1, bn=bn, pooling=True,
                      compute_dtype=cd)
    assert out2.shape == ref2.shape == (N, C_out, H // 2, W // 2)
    assert jnp.allclose(out2, ref2, **tol), "mismatch: conv+relu+bn+pool"

    # 3) dilation=2 path
    out3 = jax.block_until_ready(
        conv_block_forward(x, weight, padding=2, dilation=2, compute_dtype=cd))
    ref3 = _reference(x, weight, padding=2, dilation=2, compute_dtype=cd)
    assert out3.shape == ref3.shape
    assert jnp.allclose(out3, ref3, **tol), "mismatch: dilated conv"

    # 4) f32 compute path (exact-precision check)
    out4 = jax.block_until_ready(
        conv_block_forward(x, weight, padding=1, dilation=1,
                           batch_norm_params=bn, pooling=True,
                           compute_dtype=jnp.float32))
    ref4 = _reference(x, weight, padding=1, dilation=1, bn=bn, pooling=True)
    assert jnp.allclose(out4, ref4, atol=2e-3, rtol=2e-3), "mismatch: f32 path"

    print("KERNEL_OK")
</pallas_src>

<mosaic_0001>
module attributes {stable_mosaic.version = 11 : i64} {
  func.func @_conv_block_kernel(%arg0: i32, %arg1: memref<1x16x256xbf16, #tpu.memory_space<vmem>>, %arg2: memref<8x144xbf16, #tpu.memory_space<vmem>>, %arg3: memref<8x1xf32, #tpu.memory_space<vmem>>, %arg4: memref<8x1xf32, #tpu.memory_space<vmem>>, %arg5: memref<1x8x224xf32, #tpu.memory_space<vmem>>) attributes {dimension_semantics = [#tpu.dimension_semantics<parallel>], iteration_bounds = array<i64: 2>, scalar_prefetch = 0 : i64, scratch_operands = 0 : i64, tpu.core_type = #tpu.core_type<tc>, window_params = [{transform_indices = @transform_0, window_bounds = array<i64: 1, 16, 256>}, {pipeline_mode = #tpu.pipeline_mode<synchronous>, transform_indices = @transform_1, window_bounds = array<i64: 8, 144>}, {pipeline_mode = #tpu.pipeline_mode<synchronous>, transform_indices = @transform_2, window_bounds = array<i64: 8, 1>}, {pipeline_mode = #tpu.pipeline_mode<synchronous>, transform_indices = @transform_3, window_bounds = array<i64: 8, 1>}, {transform_indices = @transform_4, window_bounds = array<i64: 1, 8, 224>}]} {
    %c0 = arith.constant 0 : index
    %c0_0 = arith.constant 0 : index
    %0 = vector.load %arg2[%c0, %c0_0] : memref<8x144xbf16, #tpu.memory_space<vmem>>, vector<8x144xbf16>
    %c0_1 = arith.constant 0 : index
    %c0_2 = arith.constant 0 : index
    %1 = vector.load %arg3[%c0_1, %c0_2] : memref<8x1xf32, #tpu.memory_space<vmem>>, vector<8x1xf32>
    %c0_3 = arith.constant 0 : index
    %c0_4 = arith.constant 0 : index
    %2 = vector.load %arg4[%c0_3, %c0_4] : memref<8x1xf32, #tpu.memory_space<vmem>>, vector<8x1xf32>
    %c0_5 = arith.constant 0 : index
    %c0_6 = arith.constant 0 : index
    %c0_7 = arith.constant 0 : index
    %3 = vector.load %arg1[%c0_5, %c0_6, %c0_7] : memref<1x16x256xbf16, #tpu.memory_space<vmem>>, vector<1x16x256xbf16>
    %4 = vector.shape_cast %3 : vector<1x16x256xbf16> to vector<16x256xbf16>
    %5 = vector.extract_strided_slice %4 {offsets = [0, 0], sizes = [16, 222], strides = [1, 1]} : vector<16x256xbf16> to vector<16x222xbf16>
    %6 = vector.extract_strided_slice %4 {offsets = [0, 1], sizes = [16, 222], strides = [1, 1]} : vector<16x256xbf16> to vector<16x222xbf16>
    %7 = vector.extract_strided_slice %4 {offsets = [0, 2], sizes = [16, 222], strides = [1, 1]} : vector<16x256xbf16> to vector<16x222xbf16>
    %8 = vector.extract_strided_slice %4 {offsets = [0, 16], sizes = [16, 222], strides = [1, 1]} : vector<16x256xbf16> to vector<16x222xbf16>
    %9 = vector.extract_strided_slice %4 {offsets = [0, 17], sizes = [16, 222], strides = [1, 1]} : vector<16x256xbf16> to vector<16x222xbf16>
    %10 = vector.extract_strided_slice %4 {offsets = [0, 18], sizes = [16, 222], strides = [1, 1]} : vector<16x256xbf16> to vector<16x222xbf16>
    %11 = vector.extract_strided_slice %4 {offsets = [0, 32], sizes = [16, 222], strides = [1, 1]} : vector<16x256xbf16> to vector<16x222xbf16>
    %12 = vector.extract_strided_slice %4 {offsets = [0, 33], sizes = [16, 222], strides = [1, 1]} : vector<16x256xbf16> to vector<16x222xbf16>
    %13 = vector.extract_strided_slice %4 {offsets = [0, 34], sizes = [16, 222], strides = [1, 1]} : vector<16x256xbf16> to vector<16x222xbf16>
    %14 = tpu.concatenate %5, %6, %7, %8, %9, %10, %11, %12, %13 in 0 : vector<16x222xbf16>, vector<16x222xbf16>, vector<16x222xbf16>, vector<16x222xbf16>, vector<16x222xbf16>, vector<16x222xbf16>, vector<16x222xbf16>, vector<16x222xbf16>, vector<16x222xbf16> -> vector<144x222xbf16>
    %cst = arith.constant dense<0.000000e+00> : vector<8x222xf32>
    %15 = tpu.matmul %0, %14, %cst {dimension_numbers = #tpu.dot_dimension_numbers<[1], [0], [0], [1], [0, 0, 1, 1], [], []>} : vector<8x144xbf16>, vector<144x222xbf16>, vector<8x222xf32> -> vector<8x222xf32>
    %cst_8 = arith.constant 0.000000e+00 : f32
    %16 = vector.broadcast %cst_8 : f32 to vector<8x222xf32>
    %17 = arith.maximumf %15, %16 : vector<8x222xf32>
    %18 = vector.broadcast %1 : vector<8x1xf32> to vector<8x222xf32>
    %19 = arith.mulf %17, %18 : vector<8x222xf32>
    %20 = vector.broadcast %2 : vector<8x1xf32> to vector<8x222xf32>
    %21 = arith.addf %19, %20 : vector<8x222xf32>
    %c0_9 = arith.constant 0 : index
    %c0_10 = arith.constant 0 : index
    %c0_11 = arith.constant 0 : index
    %22 = vector.load %arg5[%c0_9, %c0_10, %c0_11] : memref<1x8x224xf32, #tpu.memory_space<vmem>>, vector<1x8x222xf32>
    %23 = vector.shape_cast %22 : vector<1x8x222xf32> to vector<8x222xf32>
    %24 = vector.shape_cast %21 : vector<8x222xf32> to vector<1x8x222xf32>
    tpu.vector_store %arg5[%c0_9, %c0_10, %c0_11], %24 {strides = array<i32>} : memref<1x8x224xf32, #tpu.memory_space<vmem>>, vector<1x8x222xf32>,
    return
  }
  func.func @transform_0(%arg0: i32) -> (i32, i32, i32) {
    %c0_i32 = arith.constant 0 : i32
    %c0_i32_0 = arith.constant 0 : i32
    %c0_i32_1 = arith.constant 0 : i32
    return %arg0, %c0_i32, %c0_i32_0 : i32, i32, i32
  }
  func.func @transform_1(%arg0: i32) -> (i32, i32) {
    %c0_i32 = arith.constant 0 : i32
    %c0_i32_0 = arith.constant 0 : i32
    %c0_i32_1 = arith.constant 0 : i32
    return %c0_i32, %c0_i32_0 : i32, i32
  }
  func.func @transform_2(%arg0: i32) -> (i32, i32) {
    %c0_i32 = arith.constant 0 : i32
    %c0_i32_0 = arith.constant 0 : i32
    %c0_i32_1 = arith.constant 0 : i32
    return %c0_i32, %c0_i32_0 : i32, i32
  }
  func.func @transform_3(%arg0: i32) -> (i32, i32) {
    %c0_i32 = arith.constant 0 : i32
    %c0_i32_0 = arith.constant 0 : i32
    %c0_i32_1 = arith.constant 0 : i32
    return %c0_i32, %c0_i32_0 : i32, i32
  }
  func.func @transform_4(%arg0: i32) -> (i32, i32, i32) {
    %c0_i32 = arith.constant 0 : i32
    %c0_i32_0 = arith.constant 0 : i32
    %c0_i32_1 = arith.constant 0 : i32
    return %arg0, %c0_i32, %c0_i32_0 : i32, i32, i32
  }
}

</mosaic_0001>

<llo_original>
// kernel: tpu_custom_call.1
$region0: #{tpu_custom_call.1}
  #allocation0 [shape = 'u32[]', space=smem, size = 0x4, offset = 0x4, fixed_abs, tag = 'smem constant byte address 0x4 - core index']
  #allocation1 [shape = 'u32[144,128]{1,0:T(1,128)}', space=vmem, size = 0x12000, scoped, tag = 'internal scratch']
  %s0 = inlined_call_operand.hbm [shape: bf16[2,16,256], index: 0, kind: input, shape index: {}]
  %s1 = inlined_call_operand.vmem [shape: bf16[8,144], index: 1, kind: input, shape index: {}]
  %s2 = inlined_call_operand.vmem [shape: f32[8,1], index: 2, kind: input, shape index: {}]
  %s3 = inlined_call_operand.vmem [shape: f32[8,1], index: 3, kind: input, shape index: {}]
  %s4 = inlined_call_operand.hbm [shape: f32[2,8,224], index: 4, kind: output, shape index: {}]
  %s5 = sld [smem:[#allocation0]]
  $region53: #{tpu_custom_call.1} parent=0
    _
  %s7 = ssub.s32 1, %s5
  %s8 = scalar_select 0, %s7, %s5
  $region1: #{tpu_custom_call.1} parent=0
    #allocation2 [shape = 'u8[16384]{0}', space=vmem, size = 0x4000, scoped, tag = 'input window, operand 0']
    #allocation3 [shape = 's32[2]{0}', space=sflag, size = 0x8, scoped, tag = 'scoped memory for tpu_custom_call.1']
    #allocation4 [shape = 's32[2]{0}', space=sflag, size = 0x8, scoped, tag = 'scoped memory for tpu_custom_call.1']
    #allocation5 [shape = 'u8[16384]{0}', space=vmem, size = 0x4000, scoped, tag = 'output window, operand 0']
    %9 = vsyncpa [#allocation3], 0
    %s10 = scalar_lea.sflag [#allocation3], 1
    %11 = vsyncpa %s10, 0
    %12 = vsyncpa [#allocation4], 0
    %s13 = scalar_lea.sflag [#allocation4], 1
    %14 = vsyncpa %s13, 0
    loop: start=0, step=1, limit=4
    $region2: #{tpu_custom_call.1} parent=1 // loop_pre_header
      _
    $region3: #{tpu_custom_call.1} parent=1 // loop_header
      %s16 = sphi 0, %s20
      %p17 = scmp.ge.s32.totalorder %s16, 4
      %s26 = sphi 0, %s28
      %s29 = sphi 0, %s26
      %s30 = sphi 0, %s29
      %s46 = sphi 0, %s30
      %s50 = sphi 0, %s50
      %s52 = sphi 0, %s50
      %s53 = sphi 0, %s52
      %s67 = sphi 0, %s53
      %s71 = sphi 0, %s71
      %s73 = sphi 0, %s71
      %s74 = sphi 0, %s73
      %s88 = sphi 0, %s74
      %s92 = sphi 0, %s92
      %s94 = sphi 0, %s92
      %s95 = sphi 0, %s94
      %s109 = sphi 0, %s95
      %s115 = sphi 0, %s117
      %s118 = sphi 0, %s115
      %s119 = sphi 0, %s118
      %s135 = sphi 0, %s119
    $region4: #{tpu_custom_call.1} parent=1 // loop_header_branch
      %19 = sbr.rel (%p17) target = $region8
    $region5: #{tpu_custom_call.1} parent=1 // loop_body
      %s21 = ssub.s32 %s16, 1
      %s22 = ssub.s32 %s16, 2
      %s23 = sadd.s32 %s16, 1
      %s24 = ssub.s32 %s16, %s23
      %p25 = scmp.eq.s32.totalorder %s24, 0
      %s27 = sadd.s32 %s26, 1
      %s28 = scalar_select %p25, %s26, %s27
      %p31 = pneg %p25
      %p32 = scmp.eq.s32.totalorder %s16, 1
      %p33 = por %p31, %p32
      %p34 = scmp.ne.s32.totalorder %s26, %s29
      %p35 = scmp.eq.s32.totalorder %s16, 0
      %p36 = por %p34, %p35
      %p37 = scmp.ne.s32.totalorder %s26, %s29
      %p38 = scmp.eq.s32.totalorder %s21, 1
      %p39 = por %p37, %p38
      %p40 = scmp.ne.s32.totalorder %s29, %s30
      %p41 = scmp.eq.s32.totalorder %s21, 0
      %p42 = por %p40, %p41
      %p43 = scmp.ne.s32.totalorder %s29, %s30
      %p44 = scmp.eq.s32.totalorder %s22, 1
      %p45 = por %p43, %p44
      %p47 = scmp.ne.s32.totalorder %s30, %s46
      %p48 = scmp.eq.s32.totalorder %s22, 0
      %p49 = por %p47, %p48
      %s51 = sadd.s32 %s50, 1
      %p54 = scmp.eq.s32.totalorder %s16, 1
      %p55 = scmp.ne.s32.totalorder %s50, %s52
      %p56 = scmp.eq.s32.totalorder %s16, 0
      %p57 = por %p55, %p56
      %p58 = scmp.ne.s32.totalorder %s50, %s52
      %p59 = scmp.eq.s32.totalorder %s21, 1
      %p60 = por %p58, %p59
      %p61 = scmp.ne.s32.totalorder %s52, %s53
      %p62 = scmp.eq.s32.totalorder %s21, 0
      %p63 = por %p61, %p62
      %p64 = scmp.ne.s32.totalorder %s52, %s53
      %p65 = scmp.eq.s32.totalorder %s22, 1
      %p66 = por %p64, %p65
      %p68 = scmp.ne.s32.totalorder %s53, %s67
      %p69 = scmp.eq.s32.totalorder %s22, 0
      %p70 = por %p68, %p69
      %s72 = sadd.s32 %s71, 1
      %p75 = scmp.eq.s32.totalorder %s16, 1
      %p76 = scmp.ne.s32.totalorder %s71, %s73
      %p77 = scmp.eq.s32.totalorder %s16, 0
      %p78 = por %p76, %p77
      %p79 = scmp.ne.s32.totalorder %s71, %s73
      %p80 = scmp.eq.s32.totalorder %s21, 1
      %p81 = por %p79, %p80
      %p82 = scmp.ne.s32.totalorder %s73, %s74
      %p83 = scmp.eq.s32.totalorder %s21, 0
      %p84 = por %p82, %p83
      %p85 = scmp.ne.s32.totalorder %s73, %s74
      %p86 = scmp.eq.s32.totalorder %s22, 1
      %p87 = por %p85, %p86
      %p89 = scmp.ne.s32.totalorder %s74, %s88
      %p90 = scmp.eq.s32.totalorder %s22, 0
      %p91 = por %p89, %p90
      %s93 = sadd.s32 %s92, 1
      %p96 = scmp.eq.s32.totalorder %s16, 1
      %p97 = scmp.ne.s32.totalorder %s92, %s94
      %p98 = scmp.eq.s32.totalorder %s16, 0
      %p99 = por %p97, %p98
      %p100 = scmp.ne.s32.totalorder %s92, %s94
      %p101 = scmp.eq.s32.totalorder %s21, 1
      %p102 = por %p100, %p101
      %p103 = scmp.ne.s32.totalorder %s94, %s95
      %p104 = scmp.eq.s32.totalorder %s21, 0
      %p105 = por %p103, %p104
      %p106 = scmp.ne.s32.totalorder %s94, %s95
      %p107 = scmp.eq.s32.totalorder %s22, 1
      %p108 = por %p106, %p107
      %p110 = scmp.ne.s32.totalorder %s95, %s109
      %p111 = scmp.eq.s32.totalorder %s22, 0
      %p112 = por %p110, %p111
      %s113 = ssub.s32 %s16, %s23
      %p114 = scmp.eq.s32.totalorder %s113, 0
      %s116 = sadd.s32 %s115, 1
      %s117 = scalar_select %p114, %s115, %s116
      %p120 = pneg %p114
      %p121 = scmp.eq.s32.totalorder %s16, 1
      %p122 = por %p120, %p121
      %p123 = scmp.ne.s32.totalorder %s115, %s118
      %p124 = scmp.eq.s32.totalorder %s16, 0
      %p125 = por %p123, %p124
      %p126 = scmp.ne.s32.totalorder %s115, %s118
      %p127 = scmp.eq.s32.totalorder %s21, 1
      %p128 = por %p126, %p127
      %p129 = scmp.ne.s32.totalorder %s118, %s119
      %p130 = scmp.eq.s32.totalorder %s21, 0
      %p131 = por %p129, %p130
      %p132 = scmp.ne.s32.totalorder %s118, %s119
      %p133 = scmp.eq.s32.totalorder %s22, 1
      %p134 = por %p132, %p133
      %p136 = scmp.ne.s32.totalorder %s119, %s135
      %p137 = scmp.eq.s32.totalorder %s22, 0
      %p138 = por %p136, %p137
      %p139 = scmp.le.s32.totalorder 1, %s16
      %p140 = scmp.lt.s32.totalorder %s16, 3
      %p141 = pnand %p139, %p140
      %p142 = pneg %p141
      // Predicated region
      $region9: #{tpu_custom_call.1} parent=5 // pred_check
        _
      $region10: #{tpu_custom_call.1} parent=5 // pred_check_branch
        %144 = sbr.rel (%p141) target = $region12
      $region11: #{tpu_custom_call.1} parent=5 // pred_region
        %s145 = ssub.s32 %s16, 1
        // Predicated region
        $region13: #{tpu_custom_call.1} parent=11 // pred_check
          %p146 = pneg %p63
        $region14: #{tpu_custom_call.1} parent=11 // pred_check_branch
          %148 = sbr.rel (%p146) target = $region16
        $region15: #{tpu_custom_call.1} parent=11 // pred_region
          _
        $region16: #{tpu_custom_call.1} parent=11 // pred_fallthru
          _
        // Predicated region
        $region17: #{tpu_custom_call.1} parent=11 // pred_check
          %p149 = pneg %p84
        $region18: #{tpu_custom_call.1} parent=11 // pred_check_branch
          %151 = sbr.rel (%p149) target = $region20
        $region19: #{tpu_custom_call.1} parent=11 // pred_region
          _
        $region20: #{tpu_custom_call.1} parent=11 // pred_fallthru
          _
        // Predicated region
        $region21: #{tpu_custom_call.1} parent=11 // pred_check
          %p152 = pneg %p105
        $region22: #{tpu_custom_call.1} parent=11 // pred_check_branch
          %154 = sbr.rel (%p152) target = $region24
        $region23: #{tpu_custom_call.1} parent=11 // pred_region
          _
        $region24: #{tpu_custom_call.1} parent=11 // pred_fallthru
          _
      $region12: #{tpu_custom_call.1} parent=5 // pred_fallthru
        _
      %p155 = scmp.lt.s32.totalorder %s16, 2
      // Predicated region
      $region25: #{tpu_custom_call.1} parent=5 // pred_check
        %p156 = pneg %p155
      $region26: #{tpu_custom_call.1} parent=5 // pred_check_branch
        %158 = sbr.rel (%p156) target = $region28
      $region27: #{tpu_custom_call.1} parent=5 // pred_region
        // Predicated region
        $region29: #{tpu_custom_call.1} parent=27 // pred_check
          %p159 = pneg %p36
        $region30: #{tpu_custom_call.1} parent=27 // pred_check_branch
          %161 = sbr.rel (%p159) target = $region32
        $region31: #{tpu_custom_call.1} parent=27 // pred_region
          %s162 = sand.u32 %s26, 1
          %s163 = scalar_lea.sflag [#allocation3], %s162
          %s164 = sand.u32 %s26, 1
          %s165 = smul.addr %s164, 16
          %s166 = scalar_lea.vmem [#allocation2], %s165
          %s168 = ssub.s32 256, 256
          %169 = vsyncadd %s163, %s168
          %s170 = smul.addr %s16, 4
          %s171 = smul.addr %s170, 64
          %s172 = scalar_lea.hbm %s0, %s171
          %s173 = sshll.u32 %s166, 4
          %s174 = int_to_ptr.vmem [resolvable:$true] %s173
          %179 = dma.hbm_to_vmem [thread:$0]  %s172, 256, %s174, %s163, 128, 128, 8
        $region32: #{tpu_custom_call.1} parent=27 // pred_fallthru
          _
      $region28: #{tpu_custom_call.1} parent=5 // pred_fallthru
        _
      %p180 = scmp.le.s32.totalorder 1, %s16
      %p181 = scmp.lt.s32.totalorder %s16, 3
      %p182 = pnand %p180, %p181
      %p183 = pneg %p182
      // Predicated region
      $region33: #{tpu_custom_call.1} parent=5 // pred_check
        _
      $region34: #{tpu_custom_call.1} parent=5 // pred_check_branch
        %185 = sbr.rel (%p182) target = $region36
      $region35: #{tpu_custom_call.1} parent=5 // pred_region
        %s186 = ssub.s32 %s16, 1
        %s187 = sand.u32 %s29, 1
        %s188 = scalar_lea.sflag [#allocation3], %s187
        %s189 = sand.u32 %s29, 1
        %s190 = smul.addr %s189, 16
        %s191 = scalar_lea.vmem [#allocation2], %s190
        // Predicated region
        $region37: #{tpu_custom_call.1} parent=35 // pred_check
          %p192 = pneg %p42
        $region38: #{tpu_custom_call.1} parent=35 // pred_check_branch
          %194 = sbr.rel (%p192) target = $region40
        $region39: #{tpu_custom_call.1} parent=35 // pred_region
          %195 = dma.done %s188, 256
        $region40: #{tpu_custom_call.1} parent=35 // pred_fallthru
          _
        %s196 = sand.u32 %s29, 1
        %s197 = scalar_lea.sflag [#allocation3], %s196
        %s198 = sand.u32 %s29, 1
        %s199 = smul.addr %s198, 16
        %s200 = scalar_lea.vmem [#allocation2], %s199
        %p201 = pneg %p42
        %p202 = pneg %p39
        %p203 = pneg %p63
        %p204 = pneg %p60
        %p205 = pneg %p84
        %p206 = pneg %p81
        %p207 = pneg %p105
        %p208 = pneg %p102
        %p209 = pneg %p131
        %p210 = pneg %p128
        %s211 = sand.u32 %s118, 1
        %s212 = scalar_lea.sflag [#allocation4], %s211
        %s213 = sand.u32 %s118, 1
        %s214 = smul.addr %s213, 16
        %s215 = scalar_lea.vmem [#allocation5], %s214
        %v217 = vld [vmem:[%s1] sm:$0xff]
        %v218 = vld [vmem:[%s2] sm:$0xff]
        %v219 = vld [vmem:[%s3] sm:$0xff]
        %v220 = vld [vmem:[%s191] sm:$0xff]
        %v221 = vld [vmem:[%s191 + $0x8] sm:$0xff]
        %v224 = vunpack.c.l.b16 %v220
        %v225 = vunpack.c.h.b16 %v220
        %v226 = vunpack.c.l.b16 %v221
        %v227 = vunpack.c.h.b16 %v221
        %v228 = vpack.c.b16 %v226, %v224
        %v229 = vpack.c.b16 %v227, %v225
        %232 = vrot.lane.b32.xlu0 %v228, 127
        %v233 = vpop.permute.xlu0 %232
        %234 = vrot.lane.b32.xlu0 %v229, 127
        %v235 = vpop.permute.xlu0 %234
        %vm236 = vcmask 1039360
        %v237 = vsel %vm236, %v233, %v235
        %240 = vrot.lane.b32.xlu0 %v228, 126
        %v241 = vpop.permute.xlu0 %240
        %242 = vrot.lane.b32.xlu0 %v229, 126
        %v243 = vpop.permute.xlu0 %242
        %vm244 = vcmask 1031168
        %v245 = vsel %vm244, %v241, %v243
        %248 = vrot.lane.b32.xlu0 %v228, 112
        %v249 = vpop.permute.xlu0 %248
        %250 = vrot.lane.b32.xlu0 %v229, 112
        %v251 = vpop.permute.xlu0 %250
        %vm252 = vcmask 916480
        %v253 = vsel %vm252, %v249, %v251
        %256 = vrot.lane.b32.xlu0 %v228, 111
        %v257 = vpop.permute.xlu0 %256
        %258 = vrot.lane.b32.xlu0 %v229, 111
        %v259 = vpop.permute.xlu0 %258
        %vm260 = vcmask 908288
        %v261 = vsel %vm260, %v257, %v259
        %264 = vrot.lane.b32.xlu0 %v228, 110
        %v265 = vpop.permute.xlu0 %264
        %266 = vrot.lane.b32.xlu0 %v229, 110
        %v267 = vpop.permute.xlu0 %266
        %vm268 = vcmask 900096
        %v269 = vsel %vm268, %v265, %v267
        %272 = vrot.lane.b32.xlu0 %v228, 96
        %v273 = vpop.permute.xlu0 %272
        %274 = vrot.lane.b32.xlu0 %v229, 96
        %v275 = vpop.permute.xlu0 %274
        %vm276 = vcmask 785408
        %v277 = vsel %vm276, %v273, %v275
        %280 = vrot.lane.b32.xlu0 %v228, 95
        %v281 = vpop.permute.xlu0 %280
        %282 = vrot.lane.b32.xlu0 %v229, 95
        %v283 = vpop.permute.xlu0 %282
        %vm284 = vcmask 777216
        %v285 = vsel %vm284, %v281, %v283
        %288 = vrot.lane.b32.xlu0 %v228, 94
        %v289 = vpop.permute.xlu0 %288
        %290 = vrot.lane.b32.xlu0 %v229, 94
        %v291 = vpop.permute.xlu0 %290
        %vm292 = vcmask 769024
        %v293 = vsel %vm292, %v289, %v291
        %v297 = vunpack.c.l.b16 %v217
        %v298 = vunpack.c.h.b16 %v217
        %v299 = vpack.c.b16 %v297, %v297
        %v300 = vpack.c.b16 %v298, %v298
        %vm302 = vcmask 130048
        %v304 = vsel %vm302, %v300, 0
        %306 = vmatprep.subr.bf16.mxu0 %v283
        %307 = vmatpush1.bf16.msra.mxu0 %v285
        %308 = vmatprep.subr.bf16.mxu0 %v275
        %309 = vmatpush1.bf16.msra.mxu0 %v277
        %310 = vmatprep.subr.bf16.mxu0 %v267
        %311 = vmatpush1.bf16.msra.mxu0 %v269
        %312 = vmatprep.subr.bf16.mxu0 %v259
        %313 = vmatpush1.bf16.msra.mxu0 %v261
        %314 = vmatprep.subr.bf16.mxu0 %v251
        %315 = vmatpush1.bf16.msra.mxu0 %v253
        %316 = vmatprep.subr.bf16.mxu0 %v243
        %317 = vmatpush1.bf16.msra.mxu0 %v245
        %318 = vmatprep.subr.bf16.mxu0 %v235
        %319 = vmatpush1.bf16.msra.mxu0 %v237
        %320 = vmatprep.subr.bf16.mxu0 %v229
        %321 = vmatpush1.bf16.msra.mxu0 %v228
        %322 = vmatprep.subr.bf16.mxu0 0
        %323 = vmatpush2.bf16.msra.mxu0 0
        %324 = vmatprep.subr.bf16.mxu0 0
        %325 = vmatpush2.bf16.msra.mxu0 0
        %326 = vmatprep.subr.bf16.mxu0 0
        %327 = vmatpush2.bf16.msra.mxu0 0
        %328 = vmatprep.subr.bf16.mxu0 0
        %329 = vmatpush2.bf16.msra.mxu0 0
        %330 = vmatprep.subr.bf16.mxu0 0
        %331 = vmatpush2.bf16.msra.mxu0 0
        %332 = vmatprep.subr.bf16.mxu0 0
        %333 = vmatpush2.bf16.msra.mxu0 0
        %334 = vmatprep.subr.bf16.mxu0 0
        %335 = vmatpush2.bf16.msra.mxu0 0
        %336 = vmatprep.subr.bf16.mxu0 %v291
        %337 = vmatpush2.bf16.msra.mxu0 %v293
        %338 = vmatprep.mubr.bf16.mxu0 %v304
        %339 = vmatmul.mubr.bf16.gmra.mxu0 %v299
        %v340 = vpop.f32.mrf.mxu0
        %v341 = vadd.f32 0.0, %v340
        %v342 = vpop.f32.mrf.mxu0
        %v343 = vadd.f32 0.0, %v342
        %v344 = vpop.f32.mrf.mxu0
        %v345 = vpop.f32.mrf.mxu0
        %346 = vdwg.mxu0
        %v347 = vmax.f32 %v341, 0.0
        %v348 = vmax.f32 %v343, 0.0
        %350 = vset.pattern.permute.xlu0 0
        %351 = vperm.xlu0 %350, %v218
        %v352 = vpop.permute.xlu0 %351
        %v354 = vmul.f32 %v347, %v352
        %v355 = vmul.f32 %v348, %v352
        %357 = vset.pattern.permute.xlu0 0
        %358 = vperm.xlu0 %357, %v219
        %v359 = vpop.permute.xlu0 %358
        %v361 = vadd.f32 %v354, %v359
        %v362 = vadd.f32 %v355, %v359
        %363 = vst [vmem:[%s215] sm:$0xff] %v361
        %vm364 = vcmask 769024
        %365 = vst.msk [vmem:[%s215 + $0x8] sm:$0xff] %vm364, %v362
        %s366 = sand.u32 %s118, 1
        %s367 = scalar_lea.sflag [#allocation4], %s366
        %s368 = sand.u32 %s118, 1
        %s369 = smul.addr %s368, 16
        %s370 = scalar_lea.vmem [#allocation5], %s369
        // Predicated region
        $region41: #{tpu_custom_call.1} parent=35 // pred_check
          %p371 = pneg %p128
        $region42: #{tpu_custom_call.1} parent=35 // pred_check_branch
          %373 = sbr.rel (%p371) target = $region44
        $region43: #{tpu_custom_call.1} parent=35 // pred_region
          %s375 = ssub.s32 256, 256
          %376 = vsyncadd %s367, %s375
          %s377 = smul.addr %s21, 2
          %s378 = smul.addr %s377, 128
          %s379 = scalar_lea.hbm %s4, %s378
          %s381 = sshll.u32 %s370, 4
          %s382 = int_to_ptr.vmem [resolvable:$true] %s381
          %384 = dma.vmem_to_hbm [thread:$0]  %s382, 256, %s379, %s367
        $region44: #{tpu_custom_call.1} parent=35 // pred_fallthru
          _
      $region36: #{tpu_custom_call.1} parent=5 // pred_fallthru
        _
      %p385 = scmp.le.s32.totalorder 2, %s16
      // Predicated region
      $region45: #{tpu_custom_call.1} parent=5 // pred_check
        %p386 = pneg %p385
      $region46: #{tpu_custom_call.1} parent=5 // pred_check_branch
        %388 = sbr.rel (%p386) target = $region48
      $region47: #{tpu_custom_call.1} parent=5 // pred_region
        %s389 = ssub.s32 %s16, 2
        // Predicated region
        $region49: #{tpu_custom_call.1} parent=47 // pred_check
          %p390 = pneg %p134
        $region50: #{tpu_custom_call.1} parent=47 // pred_check_branch
          %392 = sbr.rel (%p390) target = $region52
        $region51: #{tpu_custom_call.1} parent=47 // pred_region
          %s393 = sand.u32 %s119, 1
          %s394 = scalar_lea.sflag [#allocation4], %s393
          %s395 = sand.u32 %s119, 1
          %s396 = smul.addr %s395, 16
          %s397 = scalar_lea.vmem [#allocation5], %s396
          %398 = dma.done %s394, 256
        $region52: #{tpu_custom_call.1} parent=47 // pred_fallthru
          _
      $region48: #{tpu_custom_call.1} parent=5 // pred_fallthru
        _
    $region6: #{tpu_custom_call.1} parent=1 // loop_footer
      %s20 = sadd.s32 1, %s16
    $region7: #{tpu_custom_call.1} parent=1 // loop_footer_branch
      %15 = sbr.rel target = $region3
    $region8: #{tpu_custom_call.1} parent=1 // loop_exit
      _
    %399 = vsyncpa [#allocation3], 1
    %s400 = scalar_lea.sflag [#allocation3], 1
    %401 = vsyncpa %s400, 1
    %402 = vsyncpa [#allocation4], 1
    %s403 = scalar_lea.sflag [#allocation4], 1
    %404 = vsyncpa %s403, 1

</llo_original>
